<compile_context>
chip_gen: v7x
topology: tpu7x:2x2x1
jax: 0.10.0
libtpu: 0.0.40
codegen_flags: <defaults>
</compile_context>

<pallas_src>
import functools

import jax
import jax.numpy as jnp
from jax.experimental import pallas as pl
from jax.experimental.pallas import tpu as pltpu


def _round_up(v, m):
    return -(-int(v) // m) * m


# -----------------------------------------------------------------------------
# Fused action-head kernel (one grid step == one block of boxes)
# -----------------------------------------------------------------------------
def _action_head_kernel(
    boxes_ref,   # [TN, 4]               f32  normalized xyxy (extended, padded)
    coords_ref,  # [2, HW_pad]           f32  row 0 = col (x), row 1 = row (y); pad = -1
    mean_ref,    # [HW_pad, C_pad]       bf16 temporal mean, slow||fast channels (zero-pad)
    w1_ref,      # [C_pad, H_pad]        bf16 fused feature-extractor FC weight (zero-pad)
    b1_ref,      # [1, H_pad]            f32
    w2_ref,      # [H_pad, NC_pad]       bf16 action predictor weight (zero-pad)
    b2_ref,      # [1, NC_pad]           f32
    pooled_ref,  # out: [TN, C_pad]      f32  ROI-pooled slow||fast features
    x_ref,       # out: [TN, H_pad]      f32  feature_extractor output
    ls_ref,      # out: [TN, 2*NC_pad]   f32  packed: logits || sigmoid scores
    *,
    height: int,
    width: int,
    nc_pad: int,
):
    boxes = boxes_ref[...]                       # [TN, 4]
    coords = coords_ref[...]                     # [2, HW_pad]
    col = coords[0:1, :]                         # [1, HW_pad]  x pixel coordinate
    row = coords[1:2, :]                         # [1, HW_pad]  y pixel coordinate

    # ---- per-box spatial membership mask over the flattened H*W axis ----
    x1 = boxes[:, 0:1] * width
    y1 = boxes[:, 1:2] * height
    x2 = boxes[:, 2:3] * width
    y2 = boxes[:, 3:4] * height

    # Padded lanes carry coord -1 -> never inside (x1, y1 >= 0).
    inside = (col >= x1) & (col < x2) & (row >= y1) & (row < y2)   # [TN, HW_pad]
    mask_f32 = inside.astype(jnp.float32)
    count = jnp.maximum(jnp.sum(mask_f32, axis=1, keepdims=True), 1.0)
    inv_count = pl.reciprocal(count, approx=True)                  # EUP slot

    # ---- ROI masked-average pooling: one bf16 MXU matmul over HW ----
    pooled = (
        jnp.dot(mask_f32.astype(jnp.bfloat16), mean_ref[...],
                preferred_element_type=jnp.float32)
        * inv_count
    )                                                              # [TN, C_pad] f32

    # ---- fused feature-extractor FC (+ReLU) over concatenated channels ----
    x = (
        jnp.dot(pooled.astype(jnp.bfloat16), w1_ref[...],
                preferred_element_type=jnp.float32)
        + b1_ref[...]
    )
    x = jnp.maximum(x, 0.0)

    # ---- predictor (dropout is identity in eval) + post-processor sigmoid ----
    logits = (
        jnp.dot(x.astype(jnp.bfloat16), w2_ref[...],
                preferred_element_type=jnp.float32)
        + b2_ref[...]
    )
    scores = jax.nn.sigmoid(logits)

    # All stores are full-lane-width (every segment width/offset is a multiple of 128).
    pooled_ref[...] = pooled
    x_ref[...] = x
    ls_ref[:, 0:nc_pad] = logits
    ls_ref[:, nc_pad:2 * nc_pad] = scores


def _tile_bytes(shape, dtype):
    """Pessimistic (8,128)-padded VMEM bytes for one buffer of `shape`."""
    if len(shape) == 1:
        shape = (1,) + tuple(shape)
    sub = -(-shape[-2] // 8) * 8
    lane = -(-shape[-1] // 128) * 128
    lead = 1
    for d in shape[:-2]:
        lead *= int(d)
    return lead * sub * lane * jnp.dtype(dtype).itemsize


# -----------------------------------------------------------------------------
# Wrapper: eval-path ROIActionHead forward
# -----------------------------------------------------------------------------
def roi_action_head_forward(
    slow_features,   # [1, C_slow, T_slow, H, W]   (PyTorch NCTHW)
    fast_features,   # [1, C_fast, T_fast, H, W]
    boxes,           # [N, 4] normalized xyxy
    object_centers,  # [No, 2]
    object_areas,    # [No]
    params,
    *,
    test_extend_scale=1.1,
    box_block=8,
):
    """Eval-path ROIActionHead forward. Returns (result, {}, {}, {}) like the module."""
    _, c_slow, t_slow, h, w = slow_features.shape
    _, c_fast, t_fast, _, _ = fast_features.shape
    hw = h * w
    c_cat = c_slow + c_fast
    n_box = boxes.shape[0]
    hidden = params["w1_slow"].shape[1]
    num_classes = params["w2"].shape[1]

    # Lane-dense padded dims (multiples of 128) for all feature-ish axes.
    hw_pad = _round_up(hw, 128)
    c_pad = _round_up(c_cat, 128)
    h_pad = _round_up(hidden, 128)
    nc_pad = _round_up(num_classes, 128)

    # ---- glue: racket feature = cat(center, area.unsqueeze(-1)) ----
    racket_feature = jnp.concatenate(
        [object_centers, object_areas[:, None]], axis=-1
    )  # [No, 3]

    # ---- glue: proposals = [box.extend(TEST.EXTEND_SCALE) for box in boxes] ----
    cx = (boxes[:, 0] + boxes[:, 2]) * 0.5
    cy = (boxes[:, 1] + boxes[:, 3]) * 0.5
    bw = (boxes[:, 2] - boxes[:, 0]) * test_extend_scale
    bh = (boxes[:, 3] - boxes[:, 1]) * test_extend_scale
    proposals = jnp.stack(
        [
            jnp.clip(cx - bw * 0.5, 0.0, 1.0),
            jnp.clip(cy - bh * 0.5, 0.0, 1.0),
            jnp.clip(cx + bw * 0.5, 0.0, 1.0),
            jnp.clip(cy + bh * 0.5, 0.0, 1.0),
        ],
        axis=1,
    ).astype(jnp.float32)

    # ---- pad boxes to a multiple of the box block (padded rows are degenerate) ----
    n_blocks = int(pl.cdiv(n_box, box_block))
    n_pad = n_blocks * box_block
    if n_pad > n_box:
        proposals = jnp.concatenate(
            [proposals, jnp.zeros((n_pad - n_box, 4), jnp.float32)], axis=0
        )

    # ---- temporal mean hoisted to XLA (mem-bound reduction; fused by XLA) ----
    slow_mean = jnp.mean(slow_features[0].astype(jnp.float32), axis=1)  # [C_slow, H, W]
    fast_mean = jnp.mean(fast_features[0].astype(jnp.float32), axis=1)  # [C_fast, H, W]
    mean_cat = jnp.concatenate(
        [slow_mean.reshape(c_slow, hw).T, fast_mean.reshape(c_fast, hw).T], axis=-1
    ).astype(jnp.bfloat16)                                              # [HW, C_cat]
    mean_cat = jnp.pad(mean_cat, ((0, hw_pad - hw), (0, c_pad - c_cat)))  # [HW_pad, C_pad]

    # ---- precomputed pixel-coordinate planes (no // or % in the kernel);
    #      padded lanes get -1 so they are never inside any box ----
    xs = jnp.arange(w, dtype=jnp.float32)
    ys = jnp.arange(h, dtype=jnp.float32)
    col_plane = jnp.tile(xs[None, :], (h, 1)).reshape(1, hw)
    row_plane = jnp.tile(ys[:, None], (1, w)).reshape(1, hw)
    coords = jnp.concatenate([col_plane, row_plane], axis=0)            # [2, HW]
    coords = jnp.pad(coords, ((0, 0), (0, hw_pad - hw)), constant_values=-1.0)

    # ---- fused / bf16 / zero-padded parameters ----
    w1_cat = jnp.concatenate(
        [params["w1_slow"], params["w1_fast"]], axis=0
    ).astype(jnp.bfloat16)                                              # [C_cat, HIDDEN]
    w1_cat = jnp.pad(w1_cat, ((0, c_pad - c_cat), (0, h_pad - hidden)))  # [C_pad, H_pad]
    b1 = jnp.pad(params["b1"].astype(jnp.float32),
                 ((0, 0), (0, h_pad - hidden)))                          # [1, H_pad]
    w2 = jnp.pad(params["w2"].astype(jnp.bfloat16),
                 ((0, h_pad - hidden), (0, nc_pad - num_classes)))       # [H_pad, NC_pad]
    b2 = jnp.pad(params["b2"].astype(jnp.float32),
                 ((0, 0), (0, nc_pad - num_classes)))                    # [1, NC_pad]

    # ---- BlockSpecs: boxes/outputs tiled over the parallel grid axis,
    #      feature mean / coords / weights resident (constant block index) ----
    in_specs = [
        pl.BlockSpec((box_block, 4), lambda i: (i, 0)),
        pl.BlockSpec((2, hw_pad), lambda i: (0, 0)),
        pl.BlockSpec((hw_pad, c_pad), lambda i: (0, 0)),
        pl.BlockSpec((c_pad, h_pad), lambda i: (0, 0)),
        pl.BlockSpec((1, h_pad), lambda i: (0, 0)),
        pl.BlockSpec((h_pad, nc_pad), lambda i: (0, 0)),
        pl.BlockSpec((1, nc_pad), lambda i: (0, 0)),
    ]
    out_specs = (
        pl.BlockSpec((box_block, c_pad), lambda i: (i, 0)),
        pl.BlockSpec((box_block, h_pad), lambda i: (i, 0)),
        pl.BlockSpec((box_block, 2 * nc_pad), lambda i: (i, 0)),
    )
    out_shape = (
        jax.ShapeDtypeStruct((n_pad, c_pad), jnp.float32),
        jax.ShapeDtypeStruct((n_pad, h_pad), jnp.float32),
        jax.ShapeDtypeStruct((n_pad, 2 * nc_pad), jnp.float32),
    )

    # ---- explicit VMEM budget: tile-padded block bytes, double-buffered ----
    block_bytes = (
        _tile_bytes((box_block, 4), jnp.float32)
        + _tile_bytes((2, hw_pad), jnp.float32)
        + _tile_bytes((hw_pad, c_pad), jnp.bfloat16)
        + _tile_bytes((c_pad, h_pad), jnp.bfloat16)
        + _tile_bytes((1, h_pad), jnp.float32)
        + _tile_bytes((h_pad, nc_pad), jnp.bfloat16)
        + _tile_bytes((1, nc_pad), jnp.float32)
        + _tile_bytes((box_block, c_pad), jnp.float32)
        + _tile_bytes((box_block, h_pad), jnp.float32)
        + _tile_bytes((box_block, 2 * nc_pad), jnp.float32)
    )
    vmem_limit = int(max(8 << 20, min(2 * block_bytes + (2 << 20), 64 << 20)))

    kernel = functools.partial(
        _action_head_kernel, height=h, width=w, nc_pad=nc_pad
    )

    pooled_pad, x_pad, ls_pad = pl.pallas_call(
        kernel,
        out_shape=out_shape,
        grid_spec=pltpu.PrefetchScalarGridSpec(
            num_scalar_prefetch=0,
            grid=(n_blocks,),
            in_specs=in_specs,
            out_specs=out_specs,
        ),
        compiler_params=pltpu.CompilerParams(
            dimension_semantics=("parallel",),
            vmem_limit_bytes=vmem_limit,
        ),
    )(proposals, coords, mean_cat, w1_cat, b1, w2, b2)

    # ---- strip box / channel padding, unpack the packed logits||scores slab ----
    x_pooled = pooled_pad[:n_box, :c_cat]                       # [N, C_slow + C_fast]
    x = x_pad[:n_box, :hidden]                                  # [N, HIDDEN]
    logits = ls_pad[:n_box, :num_classes]                       # [N, NUM_CLASSES]
    scores = ls_pad[:n_box, nc_pad:nc_pad + num_classes]        # [N, NUM_CLASSES]

    result = {
        "boxes": boxes,
        "scores": scores,            # post-processed (sigmoid) action scores
        "action_logits": logits,
        "person_features": x,
        "pooled_feature": x_pooled,
        "racket_feature": racket_feature,
    }
    # Mirrors `return (result, {}, {}, {})` of the eval path.
    return result, {}, {}, {}


# -----------------------------------------------------------------------------
# Deterministic parameters / inputs
# -----------------------------------------------------------------------------
def make_params(key, c_slow, c_fast, hidden, num_classes):
    k1, k2, k3 = jax.random.split(key, 3)
    return {
        "w1_slow": (0.02 * jax.random.normal(k1, (c_slow, hidden))).astype(jnp.float32),
        "w1_fast": (0.02 * jax.random.normal(k2, (c_fast, hidden))).astype(jnp.float32),
        "b1": jnp.zeros((1, hidden), jnp.float32),
        "w2": (0.02 * jax.random.normal(k3, (hidden, num_classes))).astype(jnp.float32),
        "b2": jnp.zeros((1, num_classes), jnp.float32),
    }


if __name__ == "__main__":
    # Small, module-consistent shapes.
    C_SLOW, T_SLOW = 8, 4
    C_FAST, T_FAST = 4, 16
    H = W = 16
    N_BOX, N_OBJ = 8, 6
    HIDDEN, NUM_CLASSES = 32, 16

    key = jax.random.PRNGKey(0)
    ks = jax.random.split(key, 6)

    slow_features = jax.random.normal(ks[0], (1, C_SLOW, T_SLOW, H, W), jnp.float32)
    fast_features = jax.random.normal(ks[1], (1, C_FAST, T_FAST, H, W), jnp.float32)

    # Random normalized person boxes (x1 < x2, y1 < y2).
    pts = jax.random.uniform(ks[2], (N_BOX, 2, 2), jnp.float32)
    boxes = jnp.concatenate([jnp.min(pts, axis=1), jnp.max(pts, axis=1)], axis=1)

    # Object boxes -> 'center' and 'area' fields used for the racket feature.
    opts = jax.random.uniform(ks[3], (N_OBJ, 2, 2), jnp.float32)
    obj_boxes = jnp.concatenate([jnp.min(opts, axis=1), jnp.max(opts, axis=1)], axis=1)
    object_centers = jnp.stack(
        [(obj_boxes[:, 0] + obj_boxes[:, 2]) * 0.5,
         (obj_boxes[:, 1] + obj_boxes[:, 3]) * 0.5],
        axis=1,
    )
    object_areas = (obj_boxes[:, 2] - obj_boxes[:, 0]) * (obj_boxes[:, 3] - obj_boxes[:, 1])

    params = make_params(ks[4], C_SLOW, C_FAST, HIDDEN, NUM_CLASSES)

    result, loss_dict, loss_weight, metric_dict = roi_action_head_forward(
        slow_features, fast_features, boxes, object_centers, object_areas, params,
        test_extend_scale=1.1,
    )
    jax.block_until_ready(result["scores"])

    assert result["scores"].shape == (N_BOX, NUM_CLASSES)
    assert result["action_logits"].shape == (N_BOX, NUM_CLASSES)
    assert result["pooled_feature"].shape == (N_BOX, C_SLOW + C_FAST)
    assert result["person_features"].shape == (N_BOX, HIDDEN)
    assert result["racket_feature"].shape == (N_OBJ, 3)
    assert bool(jnp.all(jnp.isfinite(result["scores"])))
    assert bool(jnp.all((result["scores"] >= 0.0) & (result["scores"] <= 1.0)))

    print("KERNEL_OK")
</pallas_src>

<mosaic_0001>
module attributes {stable_mosaic.version = 11 : i64} {
  func.func @_action_head_kernel(%arg0: i32, %arg1: memref<8x4xf32, #tpu.memory_space<vmem>>, %arg2: memref<2x256xf32, #tpu.memory_space<vmem>>, %arg3: memref<256x128xbf16, #tpu.memory_space<vmem>>, %arg4: memref<128x128xbf16, #tpu.memory_space<vmem>>, %arg5: memref<1x128xf32, #tpu.memory_space<vmem>>, %arg6: memref<128x128xbf16, #tpu.memory_space<vmem>>, %arg7: memref<1x128xf32, #tpu.memory_space<vmem>>, %arg8: memref<8x128xf32, #tpu.memory_space<vmem>>, %arg9: memref<8x128xf32, #tpu.memory_space<vmem>>, %arg10: memref<8x256xf32, #tpu.memory_space<vmem>>) attributes {dimension_semantics = [#tpu.dimension_semantics<parallel>], iteration_bounds = array<i64: 1>, scalar_prefetch = 0 : i64, scratch_operands = 0 : i64, tpu.core_type = #tpu.core_type<tc>, window_params = [{transform_indices = @transform_0, window_bounds = array<i64: 8, 4>}, {pipeline_mode = #tpu.pipeline_mode<synchronous>, transform_indices = @transform_1, window_bounds = array<i64: 2, 256>}, {pipeline_mode = #tpu.pipeline_mode<synchronous>, transform_indices = @transform_2, window_bounds = array<i64: 256, 128>}, {pipeline_mode = #tpu.pipeline_mode<synchronous>, transform_indices = @transform_3, window_bounds = array<i64: 128, 128>}, {pipeline_mode = #tpu.pipeline_mode<synchronous>, transform_indices = @transform_4, window_bounds = array<i64: 1, 128>}, {pipeline_mode = #tpu.pipeline_mode<synchronous>, transform_indices = @transform_5, window_bounds = array<i64: 128, 128>}, {pipeline_mode = #tpu.pipeline_mode<synchronous>, transform_indices = @transform_6, window_bounds = array<i64: 1, 128>}, {transform_indices = @transform_7, window_bounds = array<i64: 8, 128>}, {transform_indices = @transform_8, window_bounds = array<i64: 8, 128>}, {transform_indices = @transform_9, window_bounds = array<i64: 8, 256>}]} {
    %c0 = arith.constant 0 : index
    %c0_0 = arith.constant 0 : index
    %0 = vector.load %arg1[%c0, %c0_0] : memref<8x4xf32, #tpu.memory_space<vmem>>, vector<8x4xf32>
    %c0_1 = arith.constant 0 : index
    %c0_2 = arith.constant 0 : index
    %1 = vector.load %arg2[%c0_1, %c0_2] : memref<2x256xf32, #tpu.memory_space<vmem>>, vector<2x256xf32>
    %2 = vector.extract_strided_slice %1 {offsets = [0, 0], sizes = [1, 256], strides = [1, 1]} : vector<2x256xf32> to vector<1x256xf32>
    %3 = vector.extract_strided_slice %1 {offsets = [1, 0], sizes = [1, 256], strides = [1, 1]} : vector<2x256xf32> to vector<1x256xf32>
    %4 = vector.extract_strided_slice %0 {offsets = [0, 0], sizes = [8, 1], strides = [1, 1]} : vector<8x4xf32> to vector<8x1xf32>
    %cst = arith.constant 1.600000e+01 : f32
    %5 = vector.broadcast %cst : f32 to vector<8x1xf32>
    %6 = arith.mulf %4, %5 : vector<8x1xf32>
    %7 = vector.extract_strided_slice %0 {offsets = [0, 1], sizes = [8, 1], strides = [1, 1]} : vector<8x4xf32> to vector<8x1xf32>
    %cst_3 = arith.constant 1.600000e+01 : f32
    %8 = vector.broadcast %cst_3 : f32 to vector<8x1xf32>
    %9 = arith.mulf %7, %8 : vector<8x1xf32>
    %10 = vector.extract_strided_slice %0 {offsets = [0, 2], sizes = [8, 1], strides = [1, 1]} : vector<8x4xf32> to vector<8x1xf32>
    %cst_4 = arith.constant 1.600000e+01 : f32
    %11 = vector.broadcast %cst_4 : f32 to vector<8x1xf32>
    %12 = arith.mulf %10, %11 : vector<8x1xf32>
    %13 = vector.extract_strided_slice %0 {offsets = [0, 3], sizes = [8, 1], strides = [1, 1]} : vector<8x4xf32> to vector<8x1xf32>
    %cst_5 = arith.constant 1.600000e+01 : f32
    %14 = vector.broadcast %cst_5 : f32 to vector<8x1xf32>
    %15 = arith.mulf %13, %14 : vector<8x1xf32>
    %16 = vector.broadcast %2 : vector<1x256xf32> to vector<8x256xf32>
    %17 = vector.broadcast %6 : vector<8x1xf32> to vector<8x256xf32>
    %18 = arith.cmpf oge, %16, %17 : vector<8x256xf32>
    %19 = vector.broadcast %2 : vector<1x256xf32> to vector<8x256xf32>
    %20 = vector.broadcast %12 : vector<8x1xf32> to vector<8x256xf32>
    %21 = arith.cmpf olt, %19, %20 : vector<8x256xf32>
    %22 = arith.andi %18, %21 : vector<8x256xi1>
    %23 = vector.broadcast %3 : vector<1x256xf32> to vector<8x256xf32>
    %24 = vector.broadcast %9 : vector<8x1xf32> to vector<8x256xf32>
    %25 = arith.cmpf oge, %23, %24 : vector<8x256xf32>
    %26 = arith.andi %22, %25 : vector<8x256xi1>
    %27 = vector.broadcast %3 : vector<1x256xf32> to vector<8x256xf32>
    %28 = vector.broadcast %15 : vector<8x1xf32> to vector<8x256xf32>
    %29 = arith.cmpf olt, %27, %28 : vector<8x256xf32>
    %30 = arith.andi %26, %29 : vector<8x256xi1>
    %31 = arith.extui %30 : vector<8x256xi1> to vector<8x256xi32>
    %32 = arith.sitofp %31 : vector<8x256xi32> to vector<8x256xf32>
    %cst_6 = arith.constant dense<0.000000e+00> : vector<8xf32>
    %33 = vector.multi_reduction <add>, %32, %cst_6 [1] : vector<8x256xf32> to vector<8xf32>
    %34 = vector.shape_cast %33 : vector<8xf32> to vector<8x1xf32>
    %cst_7 = arith.constant 1.000000e+00 : f32
    %35 = vector.broadcast %cst_7 : f32 to vector<8x1xf32>
    %36 = arith.maximumf %34, %35 : vector<8x1xf32>
    %37 = tpu.reciprocal %36 {approx = true} : vector<8x1xf32> -> vector<8x1xf32>
    %38 = arith.truncf %32 : vector<8x256xf32> to vector<8x256xbf16>
    %c0_8 = arith.constant 0 : index
    %c0_9 = arith.constant 0 : index
    %39 = vector.load %arg3[%c0_8, %c0_9] : memref<256x128xbf16, #tpu.memory_space<vmem>>, vector<256x128xbf16>
    %cst_10 = arith.constant dense<0.000000e+00> : vector<8x128xf32>
    %40 = tpu.matmul %38, %39, %cst_10 {dimension_numbers = #tpu.dot_dimension_numbers<[1], [0], [0], [1], [0, 0, 1, 1], [], []>} : vector<8x256xbf16>, vector<256x128xbf16>, vector<8x128xf32> -> vector<8x128xf32>
    %41 = vector.broadcast %37 : vector<8x1xf32> to vector<8x128xf32>
    %42 = arith.mulf %40, %41 : vector<8x128xf32>
    %43 = arith.truncf %42 : vector<8x128xf32> to vector<8x128xbf16>
    %c0_11 = arith.constant 0 : index
    %c0_12 = arith.constant 0 : index
    %44 = vector.load %arg4[%c0_11, %c0_12] : memref<128x128xbf16, #tpu.memory_space<vmem>>, vector<128x128xbf16>
    %cst_13 = arith.constant dense<0.000000e+00> : vector<8x128xf32>
    %45 = tpu.matmul %43, %44, %cst_13 {dimension_numbers = #tpu.dot_dimension_numbers<[1], [0], [0], [1], [0, 0, 1, 1], [], []>} : vector<8x128xbf16>, vector<128x128xbf16>, vector<8x128xf32> -> vector<8x128xf32>
    %c0_14 = arith.constant 0 : index
    %c0_15 = arith.constant 0 : index
    %46 = vector.load %arg5[%c0_14, %c0_15] : memref<1x128xf32, #tpu.memory_space<vmem>>, vector<1x128xf32>
    %47 = vector.broadcast %46 : vector<1x128xf32> to vector<8x128xf32>
    %48 = arith.addf %45, %47 : vector<8x128xf32>
    %cst_16 = arith.constant 0.000000e+00 : f32
    %49 = vector.broadcast %cst_16 : f32 to vector<8x128xf32>
    %50 = arith.maximumf %48, %49 : vector<8x128xf32>
    %51 = arith.truncf %50 : vector<8x128xf32> to vector<8x128xbf16>
    %c0_17 = arith.constant 0 : index
    %c0_18 = arith.constant 0 : index
    %52 = vector.load %arg6[%c0_17, %c0_18] : memref<128x128xbf16, #tpu.memory_space<vmem>>, vector<128x128xbf16>
    %cst_19 = arith.constant dense<0.000000e+00> : vector<8x128xf32>
    %53 = tpu.matmul %51, %52, %cst_19 {dimension_numbers = #tpu.dot_dimension_numbers<[1], [0], [0], [1], [0, 0, 1, 1], [], []>} : vector<8x128xbf16>, vector<128x128xbf16>, vector<8x128xf32> -> vector<8x128xf32>
    %c0_20 = arith.constant 0 : index
    %c0_21 = arith.constant 0 : index
    %54 = vector.load %arg7[%c0_20, %c0_21] : memref<1x128xf32, #tpu.memory_space<vmem>>, vector<1x128xf32>
    %55 = vector.broadcast %54 : vector<1x128xf32> to vector<8x128xf32>
    %56 = arith.addf %53, %55 : vector<8x128xf32>
    %57 = arith.negf %56 : vector<8x128xf32>
    %58 = math.exp %57 : vector<8x128xf32>
    %cst_22 = arith.constant 1.000000e+00 : f32
    %59 = vector.broadcast %cst_22 : f32 to vector<8x128xf32>
    %60 = arith.addf %59, %58 : vector<8x128xf32>
    %61 = arith.divf %59, %60 : vector<8x128xf32>
    %c0_23 = arith.constant 0 : index
    %c0_24 = arith.constant 0 : index
    %62 = vector.load %arg8[%c0_23, %c0_24] : memref<8x128xf32, #tpu.memory_space<vmem>>, vector<8x128xf32>
    tpu.vector_store %arg8[%c0_23, %c0_24], %42 {strides = array<i32>} : memref<8x128xf32, #tpu.memory_space<vmem>>, vector<8x128xf32>,
    %c0_25 = arith.constant 0 : index
    %c0_26 = arith.constant 0 : index
    %63 = vector.load %arg9[%c0_25, %c0_26] : memref<8x128xf32, #tpu.memory_space<vmem>>, vector<8x128xf32>
    tpu.vector_store %arg9[%c0_25, %c0_26], %50 {strides = array<i32>} : memref<8x128xf32, #tpu.memory_space<vmem>>, vector<8x128xf32>,
    %c0_27 = arith.constant 0 : index
    %c0_28 = arith.constant 0 : index
    %64 = vector.load %arg10[%c0_27, %c0_28] : memref<8x256xf32, #tpu.memory_space<vmem>>, vector<8x128xf32>
    tpu.vector_store %arg10[%c0_27, %c0_28], %56 {strides = array<i32>} : memref<8x256xf32, #tpu.memory_space<vmem>>, vector<8x128xf32>,
    %c0_29 = arith.constant 0 : index
    %c128 = arith.constant 128 : index
    %65 = vector.load %arg10[%c0_29, %c128] : memref<8x256xf32, #tpu.memory_space<vmem>>, vector<8x128xf32>
    tpu.vector_store %arg10[%c0_29, %c128], %61 {strides = array<i32>} : memref<8x256xf32, #tpu.memory_space<vmem>>, vector<8x128xf32>,
    return
  }
  func.func @transform_0(%arg0: i32) -> (i32, i32) {
    %c0_i32 = arith.constant 0 : i32
    %c0_i32_0 = arith.constant 0 : i32
    return %arg0, %c0_i32 : i32, i32
  }
  func.func @transform_1(%arg0: i32) -> (i32, i32) {
    %c0_i32 = arith.constant 0 : i32
    %c0_i32_0 = arith.constant 0 : i32
    %c0_i32_1 = arith.constant 0 : i32
    return %c0_i32, %c0_i32_0 : i32, i32
  }
  func.func @transform_2(%arg0: i32) -> (i32, i32) {
    %c0_i32 = arith.constant 0 : i32
    %c0_i32_0 = arith.constant 0 : i32
    %c0_i32_1 = arith.constant 0 : i32
    return %c0_i32, %c0_i32_0 : i32, i32
  }
  func.func @transform_3(%arg0: i32) -> (i32, i32) {
    %c0_i32 = arith.constant 0 : i32
    %c0_i32_0 = arith.constant 0 : i32
    %c0_i32_1 = arith.constant 0 : i32
    return %c0_i32, %c0_i32_0 : i32, i32
  }
  func.func @transform_4(%arg0: i32) -> (i32, i32) {
    %c0_i32 = arith.constant 0 : i32
    %c0_i32_0 = arith.constant 0 : i32
    %c0_i32_1 = arith.constant 0 : i32
    return %c0_i32, %c0_i32_0 : i32, i32
  }
  func.func @transform_5(%arg0: i32) -> (i32, i32) {
    %c0_i32 = arith.constant 0 : i32
    %c0_i32_0 = arith.constant 0 : i32
    %c0_i32_1 = arith.constant 0 : i32
    return %c0_i32, %c0_i32_0 : i32, i32
  }
  func.func @transform_6(%arg0: i32) -> (i32, i32) {
    %c0_i32 = arith.constant 0 : i32
    %c0_i32_0 = arith.constant 0 : i32
    %c0_i32_1 = arith.constant 0 : i32
    return %c0_i32, %c0_i32_0 : i32, i32
  }
  func.func @transform_7(%arg0: i32) -> (i32, i32) {
    %c0_i32 = arith.constant 0 : i32
    %c0_i32_0 = arith.constant 0 : i32
    return %arg0, %c0_i32 : i32, i32
  }
  func.func @transform_8(%arg0: i32) -> (i32, i32) {
    %c0_i32 = arith.constant 0 : i32
    %c0_i32_0 = arith.constant 0 : i32
    return %arg0, %c0_i32 : i32, i32
  }
  func.func @transform_9(%arg0: i32) -> (i32, i32) {
    %c0_i32 = arith.constant 0 : i32
    %c0_i32_0 = arith.constant 0 : i32
    return %arg0, %c0_i32 : i32, i32
  }
}

</mosaic_0001>

<llo_original>
// kernel: tpu_custom_call.1
$region0: #{tpu_custom_call.1}
  #allocation0 [shape = 'u32[]', space=smem, size = 0x4, offset = 0x4, fixed_abs, tag = 'smem constant byte address 0x4 - core index']
  #allocation1 [shape = 'u32[144,128]{1,0:T(1,128)}', space=vmem, size = 0x12000, scoped, tag = 'internal scratch']
  %s0 = inlined_call_operand.vmem [shape: f32[8,4], index: 0, kind: input, shape index: {}]
  %s1 = inlined_call_operand.vmem [shape: f32[2,256], index: 1, kind: input, shape index: {}]
  %s2 = inlined_call_operand.hbm [shape: bf16[256,128], index: 2, kind: input, shape index: {}]
  %s3 = inlined_call_operand.hbm [shape: bf16[128,128], index: 3, kind: input, shape index: {}]
  %s4 = inlined_call_operand.vmem [shape: f32[1,128], index: 4, kind: input, shape index: {}]
  %s5 = inlined_call_operand.hbm [shape: bf16[128,128], index: 5, kind: input, shape index: {}]
  %s6 = inlined_call_operand.vmem [shape: f32[1,128], index: 6, kind: input, shape index: {}]
  %s7 = inlined_call_operand.hbm [shape: f32[8,128], index: 7, kind: output, shape index: {0}]
  %s8 = inlined_call_operand.hbm [shape: f32[8,128], index: 8, kind: output, shape index: {1}]
  %s9 = inlined_call_operand.hbm [shape: f32[8,256], index: 9, kind: output, shape index: {2}]
  %10 = xla_tuple %s7, %s8, %s9
  %s11 = sld [smem:[#allocation0]]
  $region66: #{tpu_custom_call.1} parent=0
    _
  %s13 = ssub.s32 1, %s11
  %s14 = scalar_select 0, %s13, %s11
  $region1: #{tpu_custom_call.1} parent=0
    #allocation2 [shape = 'u8[65536]{0}', space=vmem, size = 0x10000, scoped, tag = 'input window, operand 2, single buffered']
    #allocation3 [shape = 's32[1]{0}', space=sflag, size = 0x4, scoped, tag = 'scoped memory for tpu_custom_call.1']
    #allocation4 [shape = 's32[1]{0}', space=sflag, size = 0x4, scoped, tag = 'scoped memory for tpu_custom_call.1']
    #allocation5 [shape = 'u8[32768]{0}', space=vmem, size = 0x8000, scoped, tag = 'input window, operand 3, single buffered']
    #allocation6 [shape = 's32[1]{0}', space=sflag, size = 0x4, scoped, tag = 'scoped memory for tpu_custom_call.1']
    #allocation7 [shape = 'u8[32768]{0}', space=vmem, size = 0x8000, scoped, tag = 'input window, operand 5, single buffered']
    #allocation8 [shape = 'u8[4096]{0}', space=vmem, size = 0x1000, scoped, tag = 'output window, operand 0, single buffered']
    #allocation9 [shape = 'u8[4096]{0}', space=vmem, size = 0x1000, scoped, tag = 'output window, operand 1, single buffered']
    #allocation10 [shape = 's32[1]{0}', space=sflag, size = 0x4, scoped, tag = 'scoped memory for tpu_custom_call.1']
    #allocation11 [shape = 'u8[8192]{0}', space=vmem, size = 0x2000, scoped, tag = 'output window, operand 2, single buffered']
    %15 = vsyncpa [#allocation3], 0
    %16 = vsyncpa [#allocation6], 0
    %17 = vsyncpa [#allocation4], 0
    %18 = vsyncpa [#allocation10], 0
    // Predicated region
    $region2: #{tpu_custom_call.1} parent=1 // pred_check
      _
    $region3: #{tpu_custom_call.1} parent=1 // pred_check_branch
      %20 = sbr.rel (0) target = $region5
    $region4: #{tpu_custom_call.1} parent=1 // pred_region
      _
    $region5: #{tpu_custom_call.1} parent=1 // pred_fallthru
      _
    // Predicated region
    $region6: #{tpu_custom_call.1} parent=1 // pred_check
      _
    $region7: #{tpu_custom_call.1} parent=1 // pred_check_branch
      %22 = sbr.rel (0) target = $region9
    $region8: #{tpu_custom_call.1} parent=1 // pred_region
      _
    $region9: #{tpu_custom_call.1} parent=1 // pred_fallthru
      _
    // Predicated region
    $region10: #{tpu_custom_call.1} parent=1 // pred_check
      _
    $region11: #{tpu_custom_call.1} parent=1 // pred_check_branch
      %24 = sbr.rel (0) target = $region13
    $region12: #{tpu_custom_call.1} parent=1 // pred_region
      %s26 = ssub.s32 2048, 2048
      %27 = vsyncadd [#allocation3], %s26
      %s28 = sshll.u32 [#allocation2], 4
      %s29 = int_to_ptr.vmem [resolvable:$true] %s28
      %34 = dma.hbm_to_vmem [thread:$0]  %s2, 2048, %s29, [#allocation3], 64, 64, 4
    $region13: #{tpu_custom_call.1} parent=1 // pred_fallthru
      _
    // Predicated region
    $region14: #{tpu_custom_call.1} parent=1 // pred_check
      _
    $region15: #{tpu_custom_call.1} parent=1 // pred_check_branch
      %36 = sbr.rel (0) target = $region17
    $region16: #{tpu_custom_call.1} parent=1 // pred_region
      %s38 = ssub.s32 1024, 1024
      %39 = vsyncadd [#allocation6], %s38
      %s40 = sshll.u32 [#allocation5], 4
      %s41 = int_to_ptr.vmem [resolvable:$true] %s40
      %46 = dma.hbm_to_vmem [thread:$0]  %s3, 1024, %s41, [#allocation6], 64, 64, 4
    $region17: #{tpu_custom_call.1} parent=1 // pred_fallthru
      _
    // Predicated region
    $region18: #{tpu_custom_call.1} parent=1 // pred_check
      _
    $region19: #{tpu_custom_call.1} parent=1 // pred_check_branch
      %48 = sbr.rel (0) target = $region21
    $region20: #{tpu_custom_call.1} parent=1 // pred_region
      _
    $region21: #{tpu_custom_call.1} parent=1 // pred_fallthru
      _
    // Predicated region
    $region22: #{tpu_custom_call.1} parent=1 // pred_check
      _
    $region23: #{tpu_custom_call.1} parent=1 // pred_check_branch
      %50 = sbr.rel (0) target = $region25
    $region24: #{tpu_custom_call.1} parent=1 // pred_region
      %s52 = ssub.s32 1024, 1024
      %53 = vsyncadd [#allocation6], %s52
      %s54 = sshll.u32 [#allocation7], 4
      %s55 = int_to_ptr.vmem [resolvable:$true] %s54
      %60 = dma.hbm_to_vmem [thread:$0]  %s5, 1024, %s55, [#allocation6], 64, 64, 4
    $region25: #{tpu_custom_call.1} parent=1 // pred_fallthru
      _
    // Predicated region
    $region26: #{tpu_custom_call.1} parent=1 // pred_check
      _
    $region27: #{tpu_custom_call.1} parent=1 // pred_check_branch
      %62 = sbr.rel (0) target = $region29
    $region28: #{tpu_custom_call.1} parent=1 // pred_region
      _
    $region29: #{tpu_custom_call.1} parent=1 // pred_fallthru
      _
    // Predicated region
    $region30: #{tpu_custom_call.1} parent=1 // pred_check
      _
    $region31: #{tpu_custom_call.1} parent=1 // pred_check_branch
      %64 = sbr.rel (0) target = $region33
    $region32: #{tpu_custom_call.1} parent=1 // pred_region
      %65 = dma.done [#allocation3], 2048
    $region33: #{tpu_custom_call.1} parent=1 // pred_fallthru
      _
    // Predicated region
    $region34: #{tpu_custom_call.1} parent=1 // pred_check
      _
    $region35: #{tpu_custom_call.1} parent=1 // pred_check_branch
      %67 = sbr.rel (0) target = $region37
    $region36: #{tpu_custom_call.1} parent=1 // pred_region
      %68 = dma.done [#allocation6], 1024
    $region37: #{tpu_custom_call.1} parent=1 // pred_fallthru
      _
    // Predicated region
    $region38: #{tpu_custom_call.1} parent=1 // pred_check
      _
    $region39: #{tpu_custom_call.1} parent=1 // pred_check_branch
      %70 = sbr.rel (0) target = $region41
    $region40: #{tpu_custom_call.1} parent=1 // pred_region
      %71 = dma.done [#allocation6], 1024
    $region41: #{tpu_custom_call.1} parent=1 // pred_fallthru
      _
    %v73 = vld [vmem:[%s0] sm:$0xff]
    %v74 = vld [vmem:[%s1] sm:$0xf]
    %v75 = vmul.f32 %v73, 16.0
    %v77 = vlaneseq
    %v78 = vshrl.u32 %v77, 7
    %v79 = vsub.s32 0, %v78
    %v80 = vrot.slane %v74, %v79
    %v81 = vlaneseq
    %v82 = vshrl.u32 %v81, 7
    %v83 = vsub.s32 2, %v82
    %v84 = vrot.slane %v74, %v83
    %v87 = vlaneseq
    %v88 = vshrl.u32 %v87, 7
    %v89 = vsub.s32 0, %v88
    %v90 = vrot.slane %v80, %v89
    %v91 = vlaneseq
    %v92 = vshrl.u32 %v91, 7
    %v93 = vsub.s32 0, %v92
    %v94 = vrot.slane %v84, %v93
    %96 = vset.pattern.permute.xlu0 0
    %97 = vperm.xlu0 %96, %v75
    %v98 = vpop.permute.xlu0 %97
    %vm100 = vcmp.ge.f32.partialorder %v90, %v98
    %vm101 = vcmp.ge.f32.partialorder %v94, %v98
    %102 = vset.pattern.permute.xlu0 2
    %103 = vperm.xlu0 %102, %v75
    %v104 = vpop.permute.xlu0 %103
    %vm106 = vcmp.lt.f32.partialorder %v90, %v104
    %vm107 = vcmp.lt.f32.partialorder %v94, %v104
    %vm108 = vmand %vm100, %vm106
    %vm109 = vmand %vm101, %vm107
    %v110 = vlaneseq
    %v111 = vshrl.u32 %v110, 7
    %v112 = vsub.s32 1, %v111
    %v113 = vrot.slane %v74, %v112
    %v114 = vlaneseq
    %v115 = vshrl.u32 %v114, 7
    %v116 = vsub.s32 3, %v115
    %v117 = vrot.slane %v74, %v116
    %v120 = vlaneseq
    %v121 = vshrl.u32 %v120, 7
    %v122 = vsub.s32 1, %v121
    %v123 = vrot.slane %v113, %v122
    %v124 = vlaneseq
    %v125 = vshrl.u32 %v124, 7
    %v126 = vsub.s32 1, %v125
    %v127 = vrot.slane %v117, %v126
    %128 = vset.pattern.permute.xlu0 1
    %129 = vperm.xlu0 %128, %v75
    %v130 = vpop.permute.xlu0 %129
    %vm132 = vcmp.ge.f32.partialorder %v123, %v130
    %vm133 = vcmp.ge.f32.partialorder %v127, %v130
    %vm134 = vmand %vm108, %vm132
    %vm135 = vmand %vm109, %vm133
    %136 = vset.pattern.permute.xlu0 3
    %137 = vperm.xlu0 %136, %v75
    %v138 = vpop.permute.xlu0 %137
    %vm140 = vcmp.lt.f32.partialorder %v123, %v138
    %vm141 = vcmp.lt.f32.partialorder %v127, %v138
    %vm142 = vmand %vm134, %vm140
    %vm143 = vmand %vm135, %vm141
    %v144 = vsel %vm142, 1, 0
    %v145 = vsel %vm143, 1, 0
    %v146 = vcvt.s32.f32 %v144
    %v147 = vcvt.s32.f32 %v145
    %v148 = vadd.f32 %v146, %v147
    %149 = vadd.xlane.f32.xlu0 %v148
    %v150 = vpop.xlane.xlu0 %149
    %v151 = vmax.f32 %v150, 1.0
    %v152 = vrcp.pop %v151
    %v153 = vpack.c.bf16 %v146, %v146
    %v154 = vpack.c.bf16 %v147, %v147
    %v155 = vld [vmem:[#allocation2] sm:$0xf]
    %v156 = vld [vmem:[#allocation2 + $0x4] sm:$0xf]
    %v157 = vld [vmem:[#allocation2 + $0x8] sm:$0xf]
    %v158 = vld [vmem:[#allocation2 + $0xc] sm:$0xf]
    %v159 = vld [vmem:[#allocation2 + $0x10] sm:$0xf]
    %v160 = vld [vmem:[#allocation2 + $0x14] sm:$0xf]
    %v161 = vld [vmem:[#allocation2 + $0x18] sm:$0xf]
    %v162 = vld [vmem:[#allocation2 + $0x1c] sm:$0xf]
    %v163 = vld [vmem:[#allocation2 + $0x20] sm:$0xf]
    %v164 = vld [vmem:[#allocation2 + $0x24] sm:$0xf]
    %v165 = vld [vmem:[#allocation2 + $0x28] sm:$0xf]
    %v166 = vld [vmem:[#allocation2 + $0x2c] sm:$0xf]
    %v167 = vld [vmem:[#allocation2 + $0x30] sm:$0xf]
    %v168 = vld [vmem:[#allocation2 + $0x34] sm:$0xf]
    %v169 = vld [vmem:[#allocation2 + $0x38] sm:$0xf]
    %v170 = vld [vmem:[#allocation2 + $0x3c] sm:$0xf]
    %v171 = vld [vmem:[#allocation2 + $0x40] sm:$0xf]
    %v172 = vld [vmem:[#allocation2 + $0x44] sm:$0xf]
    %v173 = vld [vmem:[#allocation2 + $0x48] sm:$0xf]
    %v174 = vld [vmem:[#allocation2 + $0x4c] sm:$0xf]
    %v175 = vld [vmem:[#allocation2 + $0x50] sm:$0xf]
    %v176 = vld [vmem:[#allocation2 + $0x54] sm:$0xf]
    %v177 = vld [vmem:[#allocation2 + $0x58] sm:$0xf]
    %v178 = vld [vmem:[#allocation2 + $0x5c] sm:$0xf]
    %v179 = vld [vmem:[#allocation2 + $0x60] sm:$0xf]
    %v180 = vld [vmem:[#allocation2 + $0x64] sm:$0xf]
    %v181 = vld [vmem:[#allocation2 + $0x68] sm:$0xf]
    %v182 = vld [vmem:[#allocation2 + $0x6c] sm:$0xf]
    %v183 = vld [vmem:[#allocation2 + $0x70] sm:$0xf]
    %v184 = vld [vmem:[#allocation2 + $0x74] sm:$0xf]
    %v185 = vld [vmem:[#allocation2 + $0x78] sm:$0xf]
    %v186 = vld [vmem:[#allocation2 + $0x7c] sm:$0xf]
    %v219 = vunpack.c.l.b16 %v155
    %v220 = vunpack.c.l.b16 %v156
    %v221 = vunpack.c.l.b16 %v157
    %v222 = vunpack.c.l.b16 %v158
    %v223 = vunpack.c.l.b16 %v159
    %v224 = vunpack.c.l.b16 %v160
    %v225 = vunpack.c.l.b16 %v161
    %v226 = vunpack.c.l.b16 %v162
    %v227 = vunpack.c.l.b16 %v163
    %v228 = vunpack.c.l.b16 %v164
    %v229 = vunpack.c.l.b16 %v165
    %v230 = vunpack.c.l.b16 %v166
    %v231 = vunpack.c.l.b16 %v167
    %v232 = vunpack.c.l.b16 %v168
    %v233 = vunpack.c.l.b16 %v169
    %v234 = vunpack.c.l.b16 %v170
    %v235 = vunpack.c.l.b16 %v171
    %v236 = vunpack.c.l.b16 %v172
    %v237 = vunpack.c.l.b16 %v173
    %v238 = vunpack.c.l.b16 %v174
    %v239 = vunpack.c.l.b16 %v175
    %v240 = vunpack.c.l.b16 %v176
    %v241 = vunpack.c.l.b16 %v177
    %v242 = vunpack.c.l.b16 %v178
    %v243 = vunpack.c.l.b16 %v179
    %v244 = vunpack.c.l.b16 %v180
    %v245 = vunpack.c.l.b16 %v181
    %v246 = vunpack.c.l.b16 %v182
    %v247 = vunpack.c.l.b16 %v183
    %v248 = vunpack.c.l.b16 %v184
    %v249 = vunpack.c.l.b16 %v185
    %v250 = vunpack.c.l.b16 %v186
    %v251 = vpack.c.b16 %v220, %v219
    %v252 = vpack.c.b16 %v222, %v221
    %v253 = vpack.c.b16 %v224, %v223
    %v254 = vpack.c.b16 %v226, %v225
    %v255 = vpack.c.b16 %v228, %v227
    %v256 = vpack.c.b16 %v230, %v229
    %v257 = vpack.c.b16 %v232, %v231
    %v258 = vpack.c.b16 %v234, %v233
    %v259 = vpack.c.b16 %v236, %v235
    %v260 = vpack.c.b16 %v238, %v237
    %v261 = vpack.c.b16 %v240, %v239
    %v262 = vpack.c.b16 %v242, %v241
    %v263 = vpack.c.b16 %v244, %v243
    %v264 = vpack.c.b16 %v246, %v245
    %v265 = vpack.c.b16 %v248, %v247
    %v266 = vpack.c.b16 %v250, %v249
    %283 = vmatprep.subr.bf16.mxu0 0
    %284 = vmatpush1.bf16.msra.mxu0 %v251
    %285 = vmatprep.subr.bf16.mxu0 0
    %286 = vmatpush1.bf16.msra.mxu0 %v252
    %287 = vmatprep.subr.bf16.mxu0 0
    %288 = vmatpush1.bf16.msra.mxu0 %v253
    %289 = vmatprep.subr.bf16.mxu0 0
    %290 = vmatpush1.bf16.msra.mxu0 %v254
    %291 = vmatprep.subr.bf16.mxu0 0
    %292 = vmatpush1.bf16.msra.mxu0 %v255
    %293 = vmatprep.subr.bf16.mxu0 0
    %294 = vmatpush1.bf16.msra.mxu0 %v256
    %295 = vmatprep.subr.bf16.mxu0 0
    %296 = vmatpush1.bf16.msra.mxu0 %v257
    %297 = vmatprep.subr.bf16.mxu0 0
    %298 = vmatpush1.bf16.msra.mxu0 %v258
    %299 = vmatprep.subr.bf16.mxu0 0
    %300 = vmatpush1.bf16.msra.mxu0 %v259
    %301 = vmatprep.subr.bf16.mxu0 0
    %302 = vmatpush1.bf16.msra.mxu0 %v260
    %303 = vmatprep.subr.bf16.mxu0 0
    %304 = vmatpush1.bf16.msra.mxu0 %v261
    %305 = vmatprep.subr.bf16.mxu0 0
    %306 = vmatpush1.bf16.msra.mxu0 %v262
    %307 = vmatprep.subr.bf16.mxu0 0
    %308 = vmatpush1.bf16.msra.mxu0 %v263
    %309 = vmatprep.subr.bf16.mxu0 0
    %310 = vmatpush1.bf16.msra.mxu0 %v264
    %311 = vmatprep.subr.bf16.mxu0 0
    %312 = vmatpush1.bf16.msra.mxu0 %v265
    %313 = vmatprep.subr.bf16.mxu0 0
    %314 = vmatpush1.bf16.msra.mxu0 %v266
    %315 = vmatprep.mubr.bf16.mxu0 %v154
    %316 = vmatmul.mubr.bf16.gmra.mrb[0].mxu0 %v153
    %v317 = vpop.f32.mrb[0].mxu0
    %v318 = vadd.f32 0.0, %v317
    %v319 = vpop.f32.mrb[0].mxu0
    %v320 = vpop.f32.mrb[0].mxu0
    %v321 = vpop.f32.mrb[0].mxu0
    %322 = vdwg.mxu0
    %v323 = vmul.f32 %v318, %v152
    %v324 = vpack.c.bf16 %v323, %v323
    %v325 = vld [vmem:[#allocation5] sm:$0xf]
    %v326 = vld [vmem:[#allocation5 + $0x4] sm:$0xf]
    %v327 = vld [vmem:[#allocation5 + $0x8] sm:$0xf]
    %v328 = vld [vmem:[#allocation5 + $0xc] sm:$0xf]
    %v329 = vld [vmem:[#allocation5 + $0x10] sm:$0xf]
    %v330 = vld [vmem:[#allocation5 + $0x14] sm:$0xf]
    %v331 = vld [vmem:[#allocation5 + $0x18] sm:$0xf]
    %v332 = vld [vmem:[#allocation5 + $0x1c] sm:$0xf]
    %v333 = vld [vmem:[#allocation5 + $0x20] sm:$0xf]
    %v334 = vld [vmem:[#allocation5 + $0x24] sm:$0xf]
    %v335 = vld [vmem:[#allocation5 + $0x28] sm:$0xf]
    %v336 = vld [vmem:[#allocation5 + $0x2c] sm:$0xf]
    %v337 = vld [vmem:[#allocation5 + $0x30] sm:$0xf]
    %v338 = vld [vmem:[#allocation5 + $0x34] sm:$0xf]
    %v339 = vld [vmem:[#allocation5 + $0x38] sm:$0xf]
    %v340 = vld [vmem:[#allocation5 + $0x3c] sm:$0xf]
    %v341 = vld [vmem:[%s4] sm:$0x1]
    %v343 = vlaneseq
    %v344 = vshrl.u32 %v343, 7
    %v345 = vsub.s32 0, %v344
    %v346 = vrot.slane %v341, %v345
    %v364 = vunpack.c.l.b16 %v325
    %v365 = vunpack.c.l.b16 %v326
    %v366 = vunpack.c.l.b16 %v327
    %v367 = vunpack.c.l.b16 %v328
    %v368 = vunpack.c.l.b16 %v329
    %v369 = vunpack.c.l.b16 %v330
    %v370 = vunpack.c.l.b16 %v331
    %v371 = vunpack.c.l.b16 %v332
    %v372 = vunpack.c.l.b16 %v333
    %v373 = vunpack.c.l.b16 %v334
    %v374 = vunpack.c.l.b16 %v335
    %v375 = vunpack.c.l.b16 %v336
    %v376 = vunpack.c.l.b16 %v337
    %v377 = vunpack.c.l.b16 %v338
    %v378 = vunpack.c.l.b16 %v339
    %v379 = vunpack.c.l.b16 %v340
    %v380 = vpack.c.b16 %v365, %v364
    %v381 = vpack.c.b16 %v367, %v366
    %v382 = vpack.c.b16 %v369, %v368
    %v383 = vpack.c.b16 %v371, %v370
    %v384 = vpack.c.b16 %v373, %v372
    %v385 = vpack.c.b16 %v375, %v374
    %v386 = vpack.c.b16 %v377, %v376
    %v387 = vpack.c.b16 %v379, %v378
    %396 = vmatprep.subr.bf16.mxu0 0
    %397 = vmatpush1.bf16.msra.mxu0 %v380
    %398 = vmatprep.subr.bf16.mxu0 0
    %399 = vmatpush1.bf16.msra.mxu0 %v381
    %400 = vmatprep.subr.bf16.mxu0 0
    %401 = vmatpush1.bf16.msra.mxu0 %v382
    %402 = vmatprep.subr.bf16.mxu0 0
    %403 = vmatpush1.bf16.msra.mxu0 %v383
    %404 = vmatprep.subr.bf16.mxu0 0
    %405 = vmatpush1.bf16.msra.mxu0 %v384
    %406 = vmatprep.subr.bf16.mxu0 0
    %407 = vmatpush1.bf16.msra.mxu0 %v385
    %408 = vmatprep.subr.bf16.mxu0 0
    %409 = vmatpush1.bf16.msra.mxu0 %v386
    %410 = vmatprep.subr.bf16.mxu0 0
    %411 = vmatpush1.bf16.msra.mxu0 %v387
    %412 = vmatprep.subr.bf16.mxu0 0
    %413 = vmatpush1.bf16.msra.mxu0 0
    %414 = vmatprep.subr.bf16.mxu0 0
    %415 = vmatpush1.bf16.msra.mxu0 0
    %416 = vmatprep.subr.bf16.mxu0 0
    %417 = vmatpush1.bf16.msra.mxu0 0
    %418 = vmatprep.subr.bf16.mxu0 0
    %419 = vmatpush1.bf16.msra.mxu0 0
    %420 = vmatprep.subr.bf16.mxu0 0
    %421 = vmatpush1.bf16.msra.mxu0 0
    %422 = vmatprep.subr.bf16.mxu0 0
    %423 = vmatpush1.bf16.msra.mxu0 0
    %424 = vmatprep.subr.bf16.mxu0 0
    %425 = vmatpush1.bf16.msra.mxu0 0
    %426 = vmatprep.subr.bf16.mxu0 0
    %427 = vmatpush1.bf16.msra.mxu0 0
    %428 = vmatprep.mubr.bf16.mxu0 0
    %429 = vmatmul.mubr.bf16.gmra.mrb[0].mxu0 %v324
    %v430 = vpop.f32.mrb[0].mxu0
    %v431 = vadd.f32 %v346, %v430
    %v432 = vpop.f32.mrb[0].mxu0
    %v433 = vpop.f32.mrb[0].mxu0
    %v434 = vpop.f32.mrb[0].mxu0
    %435 = vdwg.mxu0
    %v436 = vmax.f32 %v431, 0.0
    %v437 = vpack.c.bf16 %v436, %v436
    %v438 = vld [vmem:[#allocation7] sm:$0xf]
    %v439 = vld [vmem:[#allocation7 + $0x4] sm:$0xf]
    %v440 = vld [vmem:[#allocation7 + $0x8] sm:$0xf]
    %v441 = vld [vmem:[#allocation7 + $0xc] sm:$0xf]
    %v442 = vld [vmem:[#allocation7 + $0x10] sm:$0xf]
    %v443 = vld [vmem:[#allocation7 + $0x14] sm:$0xf]
    %v444 = vld [vmem:[#allocation7 + $0x18] sm:$0xf]
    %v445 = vld [vmem:[#allocation7 + $0x1c] sm:$0xf]
    %v446 = vld [vmem:[#allocation7 + $0x20] sm:$0xf]
    %v447 = vld [vmem:[#allocation7 + $0x24] sm:$0xf]
    %v448 = vld [vmem:[#allocation7 + $0x28] sm:$0xf]
    %v449 = vld [vmem:[#allocation7 + $0x2c] sm:$0xf]
    %v450 = vld [vmem:[#allocation7 + $0x30] sm:$0xf]
    %v451 = vld [vmem:[#allocation7 + $0x34] sm:$0xf]
    %v452 = vld [vmem:[#allocation7 + $0x38] sm:$0xf]
    %v453 = vld [vmem:[#allocation7 + $0x3c] sm:$0xf]
    %v454 = vld [vmem:[%s6] sm:$0x1]
    %v456 = vlaneseq
    %v457 = vshrl.u32 %v456, 7
    %v458 = vsub.s32 0, %v457
    %v459 = vrot.slane %v454, %v458
    %v477 = vunpack.c.l.b16 %v438
    %v478 = vunpack.c.l.b16 %v439
    %v479 = vunpack.c.l.b16 %v440
    %v480 = vunpack.c.l.b16 %v441
    %v481 = vunpack.c.l.b16 %v442
    %v482 = vunpack.c.l.b16 %v443
    %v483 = vunpack.c.l.b16 %v444
    %v484 = vunpack.c.l.b16 %v445
    %v485 = vunpack.c.l.b16 %v446
    %v486 = vunpack.c.l.b16 %v447
    %v487 = vunpack.c.l.b16 %v448
    %v488 = vunpack.c.l.b16 %v449
    %v489 = vunpack.c.l.b16 %v450
    %v490 = vunpack.c.l.b16 %v451
    %v491 = vunpack.c.l.b16 %v452
    %v492 = vunpack.c.l.b16 %v453
    %v493 = vpack.c.b16 %v478, %v477
    %v494 = vpack.c.b16 %v480, %v479
    %v495 = vpack.c.b16 %v482, %v481
    %v496 = vpack.c.b16 %v484, %v483
    %v497 = vpack.c.b16 %v486, %v485
    %v498 = vpack.c.b16 %v488, %v487
    %v499 = vpack.c.b16 %v490, %v489
    %v500 = vpack.c.b16 %v492, %v491
    %509 = vmatprep.subr.bf16.mxu0 0
    %510 = vmatpush1.bf16.msra.mxu0 %v493
    %511 = vmatprep.subr.bf16.mxu0 0
    %512 = vmatpush1.bf16.msra.mxu0 %v494
    %513 = vmatprep.subr.bf16.mxu0 0
    %514 = vmatpush1.bf16.msra.mxu0 %v495
    %515 = vmatprep.subr.bf16.mxu0 0
    %516 = vmatpush1.bf16.msra.mxu0 %v496
    %517 = vmatprep.subr.bf16.mxu0 0
    %518 = vmatpush1.bf16.msra.mxu0 %v497
    %519 = vmatprep.subr.bf16.mxu0 0
    %520 = vmatpush1.bf16.msra.mxu0 %v498
    %521 = vmatprep.subr.bf16.mxu0 0
    %522 = vmatpush1.bf16.msra.mxu0 %v499
    %523 = vmatprep.subr.bf16.mxu0 0
    %524 = vmatpush1.bf16.msra.mxu0 %v500
    %525 = vmatprep.subr.bf16.mxu0 0
    %526 = vmatpush1.bf16.msra.mxu0 0
    %527 = vmatprep.subr.bf16.mxu0 0
    %528 = vmatpush1.bf16.msra.mxu0 0
    %529 = vmatprep.subr.bf16.mxu0 0
    %530 = vmatpush1.bf16.msra.mxu0 0
    %531 = vmatprep.subr.bf16.mxu0 0
    %532 = vmatpush1.bf16.msra.mxu0 0
    %533 = vmatprep.subr.bf16.mxu0 0
    %534 = vmatpush1.bf16.msra.mxu0 0
    %535 = vmatprep.subr.bf16.mxu0 0
    %536 = vmatpush1.bf16.msra.mxu0 0
    %537 = vmatprep.subr.bf16.mxu0 0
    %538 = vmatpush1.bf16.msra.mxu0 0
    %539 = vmatprep.subr.bf16.mxu0 0
    %540 = vmatpush1.bf16.msra.mxu0 0
    %541 = vmatprep.mubr.bf16.mxu0 0
    %542 = vmatmul.mubr.bf16.gmra.mrb[0].mxu0 %v437
    %v543 = vpop.f32.mrb[0].mxu0
    %v544 = vadd.f32 %v459, %v543
    %v545 = vpop.f32.mrb[0].mxu0
    %v546 = vpop.f32.mrb[0].mxu0
    %v547 = vpop.f32.mrb[0].mxu0
    %548 = vdwg.mxu0
    %v549 = vxor.u32 %v544, 2147483648
    %v550 = vmul.f32 %v549, 1.442695
    %v551 = vpow.pop %v550
    %v552 = vadd.f32 %v551, 1.0
    %v553 = vrcp.pop %v552
    %v554 = vmul.f32 1.0, %v553
    %555 = vst [vmem:[#allocation8] sm:$0xff] %v323
    %556 = vst [vmem:[#allocation9] sm:$0xff] %v436
    %557 = vst [vmem:[#allocation11] sm:$0xff] %v544
    %558 = vst [vmem:[#allocation11 + $0x8] sm:$0xff] %v554
    // Predicated region
    $region42: #{tpu_custom_call.1} parent=1 // pred_check
      _
    $region43: #{tpu_custom_call.1} parent=1 // pred_check_branch
      %560 = sbr.rel (0) target = $region45
    $region44: #{tpu_custom_call.1} parent=1 // pred_region
      %s562 = ssub.s32 128, 128
      %563 = vsyncadd [#allocation4], %s562
      %s565 = sshll.u32 [#allocation8], 4
      %s566 = int_to_ptr.vmem [resolvable:$true] %s565
      %568 = dma.vmem_to_hbm [thread:$0]  %s566, 128, %s7, [#allocation4]
    $region45: #{tpu_custom_call.1} parent=1 // pred_fallthru
      _
    // Predicated region
    $region46: #{tpu_custom_call.1} parent=1 // pred_check
      _
    $region47: #{tpu_custom_call.1} parent=1 // pred_check_branch
      %570 = sbr.rel (0) target = $region49
    $region48: #{tpu_custom_call.1} parent=1 // pred_region
      %s572 = ssub.s32 128, 128
      %573 = vsyncadd [#allocation10], %s572
      %s575 = sshll.u32 [#allocation9], 4
      %s576 = int_to_ptr.vmem [resolvable:$true] %s575
      %578 = dma.vmem_to_hbm [thread:$0]  %s576, 128, %s8, [#allocation10]
    $region49: #{tpu_custom_call.1} parent=1 // pred_fallthru
      _
    // Predicated region
    $region50: #{tpu_custom_call.1} parent=1 // pred_check
      _
    $region51: #{tpu_custom_call.1} parent=1 // pred_check_branch
      %580 = sbr.rel (0) target = $region53
    $region52: #{tpu_custom_call.1} parent=1 // pred_region
      %s582 = ssub.s32 256, 256
      %583 = vsyncadd [#allocation10], %s582
      %s585 = sshll.u32 [#allocation11], 4
      %s586 = int_to_ptr.vmem [resolvable:$true] %s585
      %588 = dma.vmem_to_hbm [thread:$0]  %s586, 256, %s9, [#allocation10]
    $region53: #{tpu_custom_call.1} parent=1 // pred_fallthru
      _
    // Predicated region
    $region54: #{tpu_custom_call.1} parent=1 // pred_check
      _
    $region55: #{tpu_custom_call.1} parent=1 // pred_check_branch
      %590 = sbr.rel (0) target = $region57
    $region56: #{tpu_custom_call.1} parent=1 // pred_region
      %591 = dma.done [#allocation4], 128
    $region57: #{tpu_custom_call.1} parent=1 // pred_fallthru
      _
    // Predicated region
    $region58: #{tpu_custom_call.1} parent=1 // pred_check
      _
    $region59: #{tpu_custom_call.1} parent=1 // pred_check_branch
      %593 = sbr.rel (0) target = $region61
    $region60: #{tpu_custom_call.1} parent=1 // pred_region
      %594 = dma.done [#allocation10], 128
    $region61: #{tpu_custom_call.1} parent=1 // pred_fallthru
      _
    // Predicated region
    $region62: #{tpu_custom_call.1} parent=1 // pred_check
      _
    $region63: #{tpu_custom_call.1} parent=1 // pred_check_branch
      %596 = sbr.rel (0) target = $region65
    $region64: #{tpu_custom_call.1} parent=1 // pred_region
      %597 = dma.done [#allocation10], 256
    $region65: #{tpu_custom_call.1} parent=1 // pred_fallthru
      _
    %598 = vsyncpa [#allocation3], 1
    %599 = vsyncpa [#allocation6], 1
    %600 = vsyncpa [#allocation4], 1
    %601 = vsyncpa [#allocation10], 1

</llo_original>
